<compile_context>
chip_gen: v7x
topology: tpu7x:2x2x1
jax: 0.10.0
libtpu: 0.0.40
codegen_flags: <defaults>
</compile_context>

<pallas_src>
import functools
import numpy as np
import jax
import jax.numpy as jnp
from jax import lax
from jax.experimental import pallas as pl
from jax.experimental.pallas import tpu as pltpu

SAMPLE_RATE = 22050

_VMEM_LIMIT = 32 * 1024 * 1024          # safe on v5e/v6e (128 MiB) and v7x (64 MiB)
_ELEMWISE_BLOCK_BYTES = 4 * 1024 * 1024  # ~4 MiB per grid step on elementwise paths
_MEDFILT_LANES = 65536                   # medfilt time tile (lanes)
_FIR_TM = 1024                           # FIR matmul M tile (stacked frames)


def _round_up(n, m):
    return ((n + m - 1) // m) * m


def _cparams(dims):
    return pltpu.CompilerParams(dimension_semantics=dims,
                                vmem_limit_bytes=_VMEM_LIMIT)


def _fir_tn_default():
    # v5e MXU is 4x128x128 -> N=128 already fills it; v6e/v7x (2x256x256) want 256.
    try:
        kind = jax.devices()[0].device_kind.lower()
        if "v5 lite" in kind or "v5e" in kind or "v5lite" in kind:
            return 128
    except Exception:
        pass
    return 256


# ---------------------------------------------------------------------------
# Kernels
# ---------------------------------------------------------------------------
def _clamp_scale_kernel(x_ref, o_ref, *, scale):
    # y = clamp(clamp(x,-1,1) * scale, -1, 1)
    x = jnp.clip(x_ref[...], -1.0, 1.0)
    o_ref[...] = jnp.clip(x * scale, -1.0, 1.0)


def _recount_kernel(x_ref, o_ref):
    # y2 = ((clamp(x)+1)/2*255).astype(uint8)/255*2 - 1 ; output clamp(y2)
    # (uint8 cast truncates; values are >= 0 here so trunc == floor)
    x = jnp.clip(x_ref[...], -1.0, 1.0)
    q = jnp.floor((x + 1.0) * 0.5 * 255.0)
    o_ref[...] = jnp.clip(q * (2.0 / 255.0) - 1.0, -1.0, 1.0)


def _medfilt3_kernel(x_ref, l_ref, r_ref, o_ref):
    # kornia.filters.median_blur with kernel (1,3): zero padding on the time axis.
    # x_ref: (BC, tn) time tile; l_ref/r_ref: (ntiles, BC, 1) resident halo tables.
    i = pl.program_id(0)
    x = jnp.clip(x_ref[...], -1.0, 1.0)
    lb = jnp.clip(l_ref[i], -1.0, 1.0)      # (BC, 1)
    rb = jnp.clip(r_ref[i], -1.0, 1.0)      # (BC, 1)
    tn = x.shape[-1]
    idx = lax.broadcasted_iota(jnp.int32, x.shape, dimension=1)
    # left neighbor: roll forward by 1 (jnp.roll semantics); right: roll by tn-1
    # (== -1 mod tn; pltpu.roll requires non-negative shifts).
    left = jnp.where(idx == 0, lb, pltpu.roll(x, shift=1, axis=1))
    right = jnp.where(idx == tn - 1, rb, pltpu.roll(x, shift=tn - 1, axis=1))
    med = jnp.maximum(jnp.minimum(left, x),
                      jnp.minimum(jnp.maximum(left, x), right))
    o_ref[...] = jnp.clip(med, -1.0, 1.0)


def _fir_matmul_kernel(xwin_ref, w_ref, o_ref):
    # FIR as Toeplitz matmul on the MXU (bf16 inputs, f32 accumulate):
    #   xwin_ref: (tm, kwin) stacked overlapping input windows (already clamped, bf16)
    #   w_ref:    (kwin, tn) constant banded weight tile (bf16, resident)
    conv = jnp.dot(xwin_ref[...], w_ref[...], preferred_element_type=jnp.float32)
    o_ref[...] = jnp.clip(conv, -1.0, 1.0)


# ---------------------------------------------------------------------------
# Filter construction (host numpy, computed once)
# ---------------------------------------------------------------------------
def _julius_lowpass_taps(cutoff, zeros=8):
    """Reproduces julius.LowPassFilter windowed-sinc taps (normalized)."""
    half = int(zeros / cutoff / 2)
    K = 2 * half + 1
    window = np.hanning(K)                       # == torch.hann_window(K, periodic=False)
    t = np.arange(-half, half + 1)
    filt = 2.0 * cutoff * window * np.sinc(2.0 * cutoff * t)
    filt = filt / filt.sum()
    return filt.astype(np.float32), half


# ---------------------------------------------------------------------------
# Tiled / pipelined wrappers
# ---------------------------------------------------------------------------
def _run_elementwise(kernel, x):
    """Sublane-dense, pad-free, software-pipelined elementwise pallas_call."""
    B, C, T = x.shape
    N = B * C * T

    # Preferred: view the whole signal as a (rows, lanes) slab (free bitcast).
    lanes = 0
    for cand in (1024, 512, 256, 128):
        if N % cand == 0:
            lanes = cand
            break

    if lanes:
        R = N // lanes
        x2d = x.reshape(R, lanes)
        rows_target = max(8, _ELEMWISE_BLOCK_BYTES // (lanes * 4))   # multiple of 8
        tr = R if R <= rows_target else rows_target
        out = pl.pallas_call(
            kernel,
            out_shape=jax.ShapeDtypeStruct((R, lanes), jnp.float32),
            grid=(pl.cdiv(R, tr),),
            in_specs=[pl.BlockSpec((tr, lanes), lambda i: (i, 0))],
            out_specs=pl.BlockSpec((tr, lanes), lambda i: (i, 0)),
            compiler_params=_cparams(("parallel",)),
        )(x2d)
        return out.reshape(B, C, T)

    # Fallback (N not a multiple of 128): (BC, T) layout, ragged last block.
    BC = B * C
    x2d = x.reshape(BC, T)
    if T < 128:
        tn = T
    else:
        tn_target = max(128, (_ELEMWISE_BLOCK_BYTES // (4 * BC)) // 128 * 128)
        tn = max(128, min(tn_target, (T // 128) * 128))
    out = pl.pallas_call(
        kernel,
        out_shape=jax.ShapeDtypeStruct((BC, T), jnp.float32),
        grid=(pl.cdiv(T, tn),),
        in_specs=[pl.BlockSpec((BC, tn), lambda i: (0, i))],
        out_specs=pl.BlockSpec((BC, tn), lambda i: (0, i)),
        compiler_params=_cparams(("parallel",)),
    )(x2d)
    return out.reshape(B, C, T)


def _run_medfilt3(x):
    """Median-of-3 with kornia zero boundary, time-tiled with resident halo tables."""
    B, C, T = x.shape
    BC = B * C
    x2d = x.reshape(BC, T)
    tn = min(_MEDFILT_LANES, _round_up(T, 128))
    Tpad = _round_up(T, tn)
    if Tpad != T:
        # zero pad == kornia zero boundary (load-bearing: right neighbor of the
        # last real sample must be 0) and keeps every tile fully valid.
        x2d = jnp.pad(x2d, ((0, 0), (0, Tpad - T)))
    ntiles = Tpad // tn

    zcol = jnp.zeros((BC, 1), jnp.float32)
    # left halo for tile i: x[:, i*tn - 1] (0 for globally-first tile)
    left_b = jnp.concatenate([zcol, x2d[:, tn - 1:-1:tn]], axis=1)      # (BC, ntiles)
    # right halo for tile i: x[:, (i+1)*tn] (0 for globally-last tile)
    right_b = jnp.concatenate([x2d[:, tn::tn], zcol], axis=1)           # (BC, ntiles)
    left_b = left_b.T[:, :, None]                                       # (ntiles, BC, 1)
    right_b = right_b.T[:, :, None]

    out = pl.pallas_call(
        _medfilt3_kernel,
        out_shape=jax.ShapeDtypeStruct((BC, Tpad), jnp.float32),
        grid=(ntiles,),
        in_specs=[pl.BlockSpec((BC, tn), lambda i: (0, i)),
                  # halo tables: constant index map -> resident in VMEM, no per-step DMA
                  pl.BlockSpec((ntiles, BC, 1), lambda i: (0, 0, 0)),
                  pl.BlockSpec((ntiles, BC, 1), lambda i: (0, 0, 0))],
        out_specs=pl.BlockSpec((BC, tn), lambda i: (0, i)),
        compiler_params=_cparams(("parallel",)),
    )(x2d, left_b, right_b)
    if Tpad != T:
        out = out[:, :T]
    return out.reshape(B, C, T)


class DistortionPallas:
    """JAX/Pallas re-implementation of the `distortion` module's forward pass."""

    def __init__(self):
        # low_band_pass: julius.LowPassFilter(2000/sr)
        self.lp_taps, self.lp_half = _julius_lowpass_taps(2000.0 / SAMPLE_RATE)
        # high_band_pass: julius.HighPassFilter(500/sr) == x - lowpass_500(x)
        # -> fold into taps: delta - lowpass taps (no in-kernel slice needed)
        hp_low, self.hp_half = _julius_lowpass_taps(500.0 / SAMPLE_RATE)
        self.hp_taps = -hp_low
        self.hp_taps[self.hp_half] += 1.0
        self.fir_tn = _fir_tn_default()         # 128 on v5e, 256 on v6e/v7x
        self._wtiles = {}                       # cached bf16 Toeplitz weight tiles

    # --- elementwise paths -------------------------------------------------
    def _scale(self, x, scale):
        return _run_elementwise(
            functools.partial(_clamp_scale_kernel, scale=float(scale)), x)

    # --- FIR band pass: tiled bf16 Toeplitz matmul --------------------------
    def _weight_tile(self, tag, taps, tn, pad2h):
        key = (tag, tn)
        if key not in self._wtiles:
            kwin = tn + pad2h
            K = taps.shape[0]
            r = np.arange(kwin)[:, None]
            c = np.arange(tn)[None, :]
            d = r - c
            W = np.where((d >= 0) & (d < K), taps[np.clip(d, 0, K - 1)], 0.0)
            self._wtiles[key] = jnp.asarray(W, dtype=jnp.bfloat16)
        return self._wtiles[key]

    def _fir(self, x, taps, half, tag):
        B, C, T = x.shape
        BC = B * C
        tn = self.fir_tn

        pad2h = _round_up(2 * half, 128)        # halo rounded to lane multiple
        kwin = tn + pad2h
        ntiles = pl.cdiv(T, tn)

        # Clamp + bf16 cast fused into the XLA im2col producer so the gathered
        # copy in HBM is bf16 (half the traffic); f32 MXU accumulate keeps precision.
        x2d = jnp.clip(x.reshape(BC, T), -1.0, 1.0).astype(jnp.bfloat16)
        # julius pads with mode='replicate' before conv1d; extra tail is zero-padded
        xpad = jnp.pad(x2d, ((0, 0), (half, half)), mode="edge")        # (BC, T+2*half)
        need = ntiles * tn + pad2h
        xpad = jnp.pad(xpad, ((0, 0), (0, need - (T + 2 * half))))

        # im2col: overlapping windows of length kwin every tn samples, stacked on
        # the matmul M axis so the MXU sees many rows, not just B*C.
        starts = jnp.arange(ntiles) * tn
        idx = starts[:, None] + jnp.arange(kwin)[None, :]               # (ntiles, kwin)
        xwin = xpad[:, idx].reshape(BC * ntiles, kwin)                  # (M, kwin) bf16

        M = BC * ntiles
        tm = M if M <= _FIR_TM else _FIR_TM     # ragged last M block handled by Pallas

        Wt = self._weight_tile(tag, taps, tn, pad2h)                    # (kwin, tn) bf16

        out = pl.pallas_call(
            _fir_matmul_kernel,
            out_shape=jax.ShapeDtypeStruct((M, tn), jnp.float32),
            grid=(pl.cdiv(M, tm),),
            in_specs=[pl.BlockSpec((tm, kwin), lambda i: (i, 0)),
                      pl.BlockSpec((kwin, tn), lambda i: (0, 0))],      # resident weight
            out_specs=pl.BlockSpec((tm, tn), lambda i: (i, 0)),
            compiler_params=_cparams(("parallel",)),
        )(xwin, Wt)

        out = out.reshape(BC, ntiles * tn)[:, :T]
        return out.reshape(B, C, T)

    # --- forward -----------------------------------------------------------
    def forward(self, x, attack_choice=1, ratio=10):
        x = jnp.asarray(x, jnp.float32)
        B, C, T = x.shape

        if attack_choice in (0, 1, 2, 3):
            # crop / crop2 only modify inputs with T > 18000 (python random crop);
            # for short audio they are the identity.
            # TODO(synk): random crop path for T > 18000 (python `random`) not reproduced.
            return self._scale(x, 1.0)
        if attack_choice == 4:  # crop_front
            cut = int(T * (ratio / 100))
            return self._scale(x[:, :, cut:], 1.0)
        if attack_choice == 5:  # crop_middle
            cut = int(T * (ratio / 100))
            begin = int((T - cut) / 2)
            end = begin + cut
            y = jnp.concatenate([x[:, :, :begin], x[:, :, end:]], axis=2)
            return self._scale(y, 1.0)
        if attack_choice == 6:  # crop_back
            begin = T - int(T * (ratio / 100))
            return self._scale(x[:, :, :begin], 1.0)
        if attack_choice == 10:  # change_top
            return self._scale(x, ratio / 100.0)
        if attack_choice == 12:  # recount
            return _run_elementwise(_recount_kernel, x)
        if attack_choice == 13:  # medfilt
            if ratio != 3:
                # TODO(synk): general (1, k) median not implemented; only k=3.
                raise NotImplementedError("medfilt only implemented for kernel (1, 3)")
            return _run_medfilt3(x)
        if attack_choice == 14:  # low_band_pass
            return self._fir(x, self.lp_taps, self.lp_half, "lp")
        if attack_choice == 15:  # high_band_pass
            return self._fir(x, self.hp_taps, self.hp_half, "hp")

        # TODO(synk): 7/8 julius resample, 9 white_noise (torch RNG), 11 mp3 codec,
        #             16-26 fixed_STFT-based attacks are not translatable here.
        raise NotImplementedError(f"attack_choice={attack_choice} not implemented")


if __name__ == "__main__":
    key = jax.random.PRNGKey(0)
    B, C, T = 2, 1, 1024
    x = 0.8 * jax.random.normal(key, (B, C, T), dtype=jnp.float32)

    model = DistortionPallas()

    outs = []
    outs.append(model.forward(x, attack_choice=1, ratio=10))   # crop -> identity
    outs.append(model.forward(x, attack_choice=4, ratio=10))   # crop_front
    outs.append(model.forward(x, attack_choice=5, ratio=10))   # crop_middle
    outs.append(model.forward(x, attack_choice=6, ratio=10))   # crop_back
    outs.append(model.forward(x, attack_choice=10, ratio=50))  # change_top
    outs.append(model.forward(x, attack_choice=12))            # recount
    outs.append(model.forward(x, attack_choice=13, ratio=3))   # medfilt (1,3)
    outs.append(model.forward(x, attack_choice=14))            # low_band_pass
    outs.append(model.forward(x, attack_choice=15))            # high_band_pass

    for o in outs:
        jax.block_until_ready(o)

    print("KERNEL_OK")
</pallas_src>

<mosaic_0001>
module attributes {stable_mosaic.version = 11 : i64} {
  func.func @_clamp_scale_kernel(%arg0: i32, %arg1: memref<2x1024xf32, #tpu.memory_space<vmem>>, %arg2: memref<2x1024xf32, #tpu.memory_space<vmem>>) attributes {dimension_semantics = [#tpu.dimension_semantics<parallel>], iteration_bounds = array<i64: 1>, scalar_prefetch = 0 : i64, scratch_operands = 0 : i64, tpu.core_type = #tpu.core_type<tc>, window_params = [{transform_indices = @transform_0, window_bounds = array<i64: 2, 1024>}, {transform_indices = @transform_1, window_bounds = array<i64: 2, 1024>}]} {
    %c0 = arith.constant 0 : index
    %c0_0 = arith.constant 0 : index
    %0 = vector.load %arg1[%c0, %c0_0] : memref<2x1024xf32, #tpu.memory_space<vmem>>, vector<2x1024xf32>
    %cst = arith.constant -1.000000e+00 : f32
    %cst_1 = arith.constant 1.000000e+00 : f32
    %1 = vector.broadcast %cst : f32 to vector<2x1024xf32>
    %2 = arith.maximumf %1, %0 : vector<2x1024xf32>
    %3 = vector.broadcast %cst_1 : f32 to vector<2x1024xf32>
    %4 = arith.minimumf %3, %2 : vector<2x1024xf32>
    %cst_2 = arith.constant 1.000000e+00 : f32
    %5 = vector.broadcast %cst_2 : f32 to vector<2x1024xf32>
    %6 = arith.mulf %4, %5 : vector<2x1024xf32>
    %cst_3 = arith.constant -1.000000e+00 : f32
    %cst_4 = arith.constant 1.000000e+00 : f32
    %7 = vector.broadcast %cst_3 : f32 to vector<2x1024xf32>
    %8 = arith.maximumf %7, %6 : vector<2x1024xf32>
    %9 = vector.broadcast %cst_4 : f32 to vector<2x1024xf32>
    %10 = arith.minimumf %9, %8 : vector<2x1024xf32>
    %c0_5 = arith.constant 0 : index
    %c0_6 = arith.constant 0 : index
    %11 = vector.load %arg2[%c0_5, %c0_6] : memref<2x1024xf32, #tpu.memory_space<vmem>>, vector<2x1024xf32>
    tpu.vector_store %arg2[%c0_5, %c0_6], %10 {strides = array<i32>} : memref<2x1024xf32, #tpu.memory_space<vmem>>, vector<2x1024xf32>,
    return
  }
  func.func @transform_0(%arg0: i32) -> (i32, i32) {
    %c0_i32 = arith.constant 0 : i32
    %c0_i32_0 = arith.constant 0 : i32
    return %arg0, %c0_i32 : i32, i32
  }
  func.func @transform_1(%arg0: i32) -> (i32, i32) {
    %c0_i32 = arith.constant 0 : i32
    %c0_i32_0 = arith.constant 0 : i32
    return %arg0, %c0_i32 : i32, i32
  }
}

</mosaic_0001>

<llo_original>
// kernel: tpu_custom_call.1
$region0: #{tpu_custom_call.1}
  #allocation0 [shape = 'u32[]', space=smem, size = 0x4, offset = 0x4, fixed_abs, tag = 'smem constant byte address 0x4 - core index']
  #allocation1 [shape = 'u32[144,128]{1,0:T(1,128)}', space=vmem, size = 0x12000, scoped, tag = 'internal scratch']
  %s0 = inlined_call_operand.hbm [shape: f32[2,1024], index: 0, kind: input, shape index: {}]
  %s1 = inlined_call_operand.hbm [shape: f32[2,1024], index: 1, kind: output, shape index: {}]
  %s2 = sld [smem:[#allocation0]]
  $region18: #{tpu_custom_call.1} parent=0
    _
  %s4 = ssub.s32 1, %s2
  %s5 = scalar_select 0, %s4, %s2
  $region1: #{tpu_custom_call.1} parent=0
    #allocation2 [shape = 'u8[8192]{0}', space=vmem, size = 0x2000, scoped, tag = 'input window, operand 0, single buffered']
    #allocation3 [shape = 's32[1]{0}', space=sflag, size = 0x4, scoped, tag = 'scoped memory for tpu_custom_call.1']
    #allocation4 [shape = 's32[1]{0}', space=sflag, size = 0x4, scoped, tag = 'scoped memory for tpu_custom_call.1']
    #allocation5 [shape = 'u8[8192]{0}', space=vmem, size = 0x2000, scoped, tag = 'output window, operand 0, single buffered']
    %6 = vsyncpa [#allocation3], 0
    %7 = vsyncpa [#allocation4], 0
    // Predicated region
    $region2: #{tpu_custom_call.1} parent=1 // pred_check
      _
    $region3: #{tpu_custom_call.1} parent=1 // pred_check_branch
      %9 = sbr.rel (0) target = $region5
    $region4: #{tpu_custom_call.1} parent=1 // pred_region
      %s11 = ssub.s32 256, 256
      %12 = vsyncadd [#allocation3], %s11
      %s14 = sshll.u32 [#allocation2], 4
      %s15 = int_to_ptr.vmem [resolvable:$true] %s14
      %17 = dma.hbm_to_vmem [thread:$0]  %s0, 256, %s15, [#allocation3]
    $region5: #{tpu_custom_call.1} parent=1 // pred_fallthru
      _
    // Predicated region
    $region6: #{tpu_custom_call.1} parent=1 // pred_check
      _
    $region7: #{tpu_custom_call.1} parent=1 // pred_check_branch
      %19 = sbr.rel (0) target = $region9
    $region8: #{tpu_custom_call.1} parent=1 // pred_region
      %20 = dma.done [#allocation3], 256
    $region9: #{tpu_custom_call.1} parent=1 // pred_fallthru
      _
    %v21 = vld [vmem:[#allocation2] sm:$0xff]
    %v22 = vld [vmem:[#allocation2 + $0x8] sm:$0xff]
    %v23 = vmax.f32 %v21, -1.0
    %v24 = vmax.f32 %v22, -1.0
    %v25 = vmin.f32 %v23, 1.0
    %v26 = vmin.f32 %v24, 1.0
    %v27 = vmax.f32 %v25, -1.0
    %v28 = vmax.f32 %v26, -1.0
    %v29 = vmin.f32 %v27, 1.0
    %v30 = vmin.f32 %v28, 1.0
    %31 = vst [vmem:[#allocation5] sm:$0xff] %v29
    %32 = vst [vmem:[#allocation5 + $0x8] sm:$0xff] %v30
    // Predicated region
    $region10: #{tpu_custom_call.1} parent=1 // pred_check
      _
    $region11: #{tpu_custom_call.1} parent=1 // pred_check_branch
      %34 = sbr.rel (0) target = $region13
    $region12: #{tpu_custom_call.1} parent=1 // pred_region
      %s36 = ssub.s32 256, 256
      %37 = vsyncadd [#allocation4], %s36
      %s39 = sshll.u32 [#allocation5], 4
      %s40 = int_to_ptr.vmem [resolvable:$true] %s39
      %42 = dma.vmem_to_hbm [thread:$0]  %s40, 256, %s1, [#allocation4]
    $region13: #{tpu_custom_call.1} parent=1 // pred_fallthru
      _
    // Predicated region
    $region14: #{tpu_custom_call.1} parent=1 // pred_check
      _
    $region15: #{tpu_custom_call.1} parent=1 // pred_check_branch
      %44 = sbr.rel (0) target = $region17
    $region16: #{tpu_custom_call.1} parent=1 // pred_region
      %45 = dma.done [#allocation4], 256
    $region17: #{tpu_custom_call.1} parent=1 // pred_fallthru
      _
    %46 = vsyncpa [#allocation3], 1
    %47 = vsyncpa [#allocation4], 1

</llo_original>
